<compile_context>
chip_gen: v7x
topology: tpu7x:2x2x1
jax: 0.10.0
libtpu: 0.0.40
codegen_flags: <defaults>
</compile_context>

<pallas_src>
import jax
import jax.numpy as jnp
from jax.experimental import pallas as pl
from jax.experimental.pallas import tpu as pltpu

# ---- static model geometry -------------------------------------------------
LAYER_SIZES = [113, 256, 64, 32, 16, 8, 4]          # PyTorch DQN(inputlen=113)
IN_SIZES    = [128, 256, 64, 32, 16, 16]            # fc1 in 113->128, fc6 in 8->16 (zero pad)
OUT_SIZES   = [256, 64, 32, 16, 16, 4]              # fc5 out 8->16 (zero pad; ReLU(0)=0)
ROW_OFFS    = [0, 128, 384, 448, 480, 496]          # row offset of each layer in wblob
W_ROWS      = 512                                   # sum(IN_SIZES); multiple of 16
W_COLS      = 256                                   # max(OUT_SIZES)
N_LAYERS    = 6


# ---- kernel ------------------------------------------------------------------
def dqn_kernel(x_ref, w_ref, b_ref, o_ref):
    """One batch tile: 5x (matmul+bias+relu) + final matmul+bias, fully unrolled.

    x_ref: (TB, 128) bf16   w_ref: (512, 256) bf16   b_ref: (6, 256) f32
    All parameters live in a single VMEM-resident block (constant index_map -> fetched
    once).  Matmuls run on the MXU in bf16 with f32 accumulation; bias add + ReLU stay
    in f32 on the VPU; activations are carried in bf16 between layers.
    """
    h = x_ref[...]                                         # (TB, 128) bf16
    for l in range(N_LAYERS):
        fin, fout, r0 = IN_SIZES[l], OUT_SIZES[l], ROW_OFFS[l]
        w = w_ref[r0:r0 + fin, :fout]                      # static slice, bf16
        y = jnp.dot(h, w, preferred_element_type=jnp.float32)   # MXU, f32 accumulate
        y = y + b_ref[l:l + 1, :fout]                      # f32 bias (broadcast over TB)
        if l < N_LAYERS - 1:
            h = jnp.maximum(y, 0.0).astype(jnp.bfloat16)   # fused ReLU + bf16 recast
        else:
            o_ref[...] = y.astype(o_ref.dtype)


# ---- host-side wrappers ------------------------------------------------------
def pack_params(params):
    """Pack 6 (W:(in,out) f32, b:(1,out) f32) pairs into one bf16 weight slab and
    one f32 bias slab.  fc1's rows are zero-padded 113 -> 128 and fc5-out / fc6-in
    are zero-padded 8 -> 16 (tile alignment); padding contributes exact zeros."""
    wblob = jnp.zeros((W_ROWS, W_COLS), jnp.float32)
    bblob = jnp.zeros((N_LAYERS, W_COLS), jnp.float32)
    for l, (w, b) in enumerate(params):
        fin, fout = w.shape
        wblob = wblob.at[ROW_OFFS[l]:ROW_OFFS[l] + fin, :fout].set(w)
        bblob = bblob.at[l, :fout].set(b.reshape(-1))
    return wblob.astype(jnp.bfloat16), bblob


def dqn_forward(x, wblob, bblob, tb=2048):
    """x: (B, 113) f32 -> (B, 4) f32."""
    B, F = x.shape
    assert F == LAYER_SIZES[0], F

    # Batch tile: multiple of 8 (sublane), capped at `tb`, and capped so large batches
    # produce >= 2 grid steps (lets the v7x megacore shard the "parallel" batch axis).
    half = max(8, pl.cdiv(pl.cdiv(B, 2), 8) * 8)
    TB = max(8, min(tb, half))
    Bp = pl.cdiv(B, TB) * TB

    # Single fused XLA pass: f32->bf16 cast + feature pad (113 -> 128) + batch pad.
    x_p = jnp.pad(x.astype(jnp.bfloat16), ((0, Bp - B), (0, IN_SIZES[0] - F)))

    out = pl.pallas_call(
        dqn_kernel,
        out_shape=jax.ShapeDtypeStruct((Bp, OUT_SIZES[-1]), jnp.float32),
        grid_spec=pltpu.PrefetchScalarGridSpec(
            num_scalar_prefetch=0,
            grid=(Bp // TB,),
            in_specs=[
                pl.BlockSpec((TB, IN_SIZES[0]), lambda i: (i, 0)),      # x tile (bf16)
                pl.BlockSpec((W_ROWS, W_COLS), lambda i: (0, 0)),       # weights (resident)
                pl.BlockSpec((N_LAYERS, W_COLS), lambda i: (0, 0)),     # biases  (resident)
            ],
            out_specs=pl.BlockSpec((TB, OUT_SIZES[-1]), lambda i: (i, 0)),
        ),
        compiler_params=pltpu.CompilerParams(
            dimension_semantics=("parallel",)),   # batch axis sharded across TCs on v7x
    )(x_p, wblob, bblob)
    return out[:B]


# ---- init + reference --------------------------------------------------------
def init_params(key):
    """Synthetic params with nn.Linear shapes (W stored as (in, out), b as (1, out))."""
    params = []
    for i in range(len(LAYER_SIZES) - 1):
        fan_in, fan_out = LAYER_SIZES[i], LAYER_SIZES[i + 1]
        key, kw, kb = jax.random.split(key, 3)
        bound = 1.0 / (fan_in ** 0.5)               # PyTorch default Linear init range
        w = jax.random.uniform(kw, (fan_in, fan_out), jnp.float32, -bound, bound)
        b = jax.random.uniform(kb, (1, fan_out), jnp.float32, -bound, bound)
        params.append((w, b))
    return params


def dqn_reference(x, params):
    """Pure-f32 reference matching the PyTorch module (accuracy baseline)."""
    h = x
    for i, (w, b) in enumerate(params):
        h = h @ w + b
        if i < len(params) - 1:
            h = jnp.maximum(h, 0.0)
    return h


if __name__ == "__main__":
    key = jax.random.PRNGKey(0)
    key, kx1, kx2 = jax.random.split(key, 3)
    params = init_params(key)
    wblob, bblob = pack_params(params)

    # Small batch (acting-loop sized): single grid step.
    B1 = 8
    x1 = jax.random.normal(kx1, (B1, LAYER_SIZES[0]), jnp.float32)
    out1 = dqn_forward(x1, wblob, bblob)
    jax.block_until_ready(out1)
    ref1 = dqn_reference(x1, params)
    assert out1.shape == (B1, 4), out1.shape
    # bf16 weights + bf16 carried activations -> loosened tolerance vs. f32-pure reference.
    assert jnp.allclose(out1, ref1, atol=2e-2, rtol=2e-2), "mismatch vs reference (B=8)"

    # Ragged batch, small tile: exercises 4 grid steps with VMEM-resident params.
    B2 = 200
    x2 = jax.random.normal(kx2, (B2, LAYER_SIZES[0]), jnp.float32)
    out2 = dqn_forward(x2, wblob, bblob, tb=64)
    jax.block_until_ready(out2)
    ref2 = dqn_reference(x2, params)
    assert out2.shape == (B2, 4), out2.shape
    assert jnp.allclose(out2, ref2, atol=2e-2, rtol=2e-2), "mismatch vs reference (B=200)"

    # Same batch with the default tile: exercises the >=2-step split for v7x megacore.
    out3 = dqn_forward(x2, wblob, bblob)
    jax.block_until_ready(out3)
    assert jnp.allclose(out3, ref2, atol=2e-2, rtol=2e-2), "mismatch vs reference (default tb)"

    print("KERNEL_OK")
</pallas_src>

<mosaic_0001>
module attributes {stable_mosaic.version = 11 : i64} {
  func.func @dqn_kernel(%arg0: i32, %arg1: memref<8x128xbf16, #tpu.memory_space<vmem>>, %arg2: memref<512x256xbf16, #tpu.memory_space<vmem>>, %arg3: memref<6x256xf32, #tpu.memory_space<vmem>>, %arg4: memref<8x4xf32, #tpu.memory_space<vmem>>) attributes {dimension_semantics = [#tpu.dimension_semantics<parallel>], iteration_bounds = array<i64: 1>, scalar_prefetch = 0 : i64, scratch_operands = 0 : i64, tpu.core_type = #tpu.core_type<tc>, window_params = [{transform_indices = @transform_0, window_bounds = array<i64: 8, 128>}, {pipeline_mode = #tpu.pipeline_mode<synchronous>, transform_indices = @transform_1, window_bounds = array<i64: 512, 256>}, {pipeline_mode = #tpu.pipeline_mode<synchronous>, transform_indices = @transform_2, window_bounds = array<i64: 6, 256>}, {transform_indices = @transform_3, window_bounds = array<i64: 8, 4>}]} {
    %c0 = arith.constant 0 : index
    %c0_0 = arith.constant 0 : index
    %0 = vector.load %arg1[%c0, %c0_0] : memref<8x128xbf16, #tpu.memory_space<vmem>>, vector<8x128xbf16>
    %c0_1 = arith.constant 0 : index
    %c0_2 = arith.constant 0 : index
    %1 = vector.load %arg2[%c0_1, %c0_2] : memref<512x256xbf16, #tpu.memory_space<vmem>>, vector<128x256xbf16>
    %cst = arith.constant dense<0.000000e+00> : vector<8x256xf32>
    %2 = tpu.matmul %0, %1, %cst {dimension_numbers = #tpu.dot_dimension_numbers<[1], [0], [0], [1], [0, 0, 1, 1], [], []>} : vector<8x128xbf16>, vector<128x256xbf16>, vector<8x256xf32> -> vector<8x256xf32>
    %c0_3 = arith.constant 0 : index
    %c0_4 = arith.constant 0 : index
    %3 = vector.load %arg3[%c0_3, %c0_4] : memref<6x256xf32, #tpu.memory_space<vmem>>, vector<1x256xf32>
    %4 = vector.broadcast %3 : vector<1x256xf32> to vector<8x256xf32>
    %5 = arith.addf %2, %4 : vector<8x256xf32>
    %cst_5 = arith.constant 0.000000e+00 : f32
    %6 = vector.broadcast %cst_5 : f32 to vector<8x256xf32>
    %7 = arith.maximumf %5, %6 : vector<8x256xf32>
    %8 = arith.truncf %7 : vector<8x256xf32> to vector<8x256xbf16>
    %c128 = arith.constant 128 : index
    %c0_6 = arith.constant 0 : index
    %9 = vector.load %arg2[%c128, %c0_6] : memref<512x256xbf16, #tpu.memory_space<vmem>>, vector<256x64xbf16>
    %cst_7 = arith.constant dense<0.000000e+00> : vector<8x64xf32>
    %10 = tpu.matmul %8, %9, %cst_7 {dimension_numbers = #tpu.dot_dimension_numbers<[1], [0], [0], [1], [0, 0, 1, 1], [], []>} : vector<8x256xbf16>, vector<256x64xbf16>, vector<8x64xf32> -> vector<8x64xf32>
    %c1 = arith.constant 1 : index
    %c0_8 = arith.constant 0 : index
    %11 = vector.load %arg3[%c1, %c0_8] : memref<6x256xf32, #tpu.memory_space<vmem>>, vector<1x64xf32>
    %12 = vector.broadcast %11 : vector<1x64xf32> to vector<8x64xf32>
    %13 = arith.addf %10, %12 : vector<8x64xf32>
    %cst_9 = arith.constant 0.000000e+00 : f32
    %14 = vector.broadcast %cst_9 : f32 to vector<8x64xf32>
    %15 = arith.maximumf %13, %14 : vector<8x64xf32>
    %16 = arith.truncf %15 : vector<8x64xf32> to vector<8x64xbf16>
    %c384 = arith.constant 384 : index
    %c0_10 = arith.constant 0 : index
    %17 = vector.load %arg2[%c384, %c0_10] : memref<512x256xbf16, #tpu.memory_space<vmem>>, vector<64x32xbf16>
    %cst_11 = arith.constant dense<0.000000e+00> : vector<8x32xf32>
    %18 = tpu.matmul %16, %17, %cst_11 {dimension_numbers = #tpu.dot_dimension_numbers<[1], [0], [0], [1], [0, 0, 1, 1], [], []>} : vector<8x64xbf16>, vector<64x32xbf16>, vector<8x32xf32> -> vector<8x32xf32>
    %c2 = arith.constant 2 : index
    %c0_12 = arith.constant 0 : index
    %19 = vector.load %arg3[%c2, %c0_12] : memref<6x256xf32, #tpu.memory_space<vmem>>, vector<1x32xf32>
    %20 = vector.broadcast %19 : vector<1x32xf32> to vector<8x32xf32>
    %21 = arith.addf %18, %20 : vector<8x32xf32>
    %cst_13 = arith.constant 0.000000e+00 : f32
    %22 = vector.broadcast %cst_13 : f32 to vector<8x32xf32>
    %23 = arith.maximumf %21, %22 : vector<8x32xf32>
    %24 = arith.truncf %23 : vector<8x32xf32> to vector<8x32xbf16>
    %c448 = arith.constant 448 : index
    %c0_14 = arith.constant 0 : index
    %25 = vector.load %arg2[%c448, %c0_14] : memref<512x256xbf16, #tpu.memory_space<vmem>>, vector<32x16xbf16>
    %cst_15 = arith.constant dense<0.000000e+00> : vector<8x16xf32>
    %26 = tpu.matmul %24, %25, %cst_15 {dimension_numbers = #tpu.dot_dimension_numbers<[1], [0], [0], [1], [0, 0, 1, 1], [], []>} : vector<8x32xbf16>, vector<32x16xbf16>, vector<8x16xf32> -> vector<8x16xf32>
    %c3 = arith.constant 3 : index
    %c0_16 = arith.constant 0 : index
    %27 = vector.load %arg3[%c3, %c0_16] : memref<6x256xf32, #tpu.memory_space<vmem>>, vector<1x16xf32>
    %28 = vector.broadcast %27 : vector<1x16xf32> to vector<8x16xf32>
    %29 = arith.addf %26, %28 : vector<8x16xf32>
    %cst_17 = arith.constant 0.000000e+00 : f32
    %30 = vector.broadcast %cst_17 : f32 to vector<8x16xf32>
    %31 = arith.maximumf %29, %30 : vector<8x16xf32>
    %32 = arith.truncf %31 : vector<8x16xf32> to vector<8x16xbf16>
    %c480 = arith.constant 480 : index
    %c0_18 = arith.constant 0 : index
    %33 = vector.load %arg2[%c480, %c0_18] : memref<512x256xbf16, #tpu.memory_space<vmem>>, vector<16x16xbf16>
    %cst_19 = arith.constant dense<0.000000e+00> : vector<8x16xf32>
    %34 = tpu.matmul %32, %33, %cst_19 {dimension_numbers = #tpu.dot_dimension_numbers<[1], [0], [0], [1], [0, 0, 1, 1], [], []>} : vector<8x16xbf16>, vector<16x16xbf16>, vector<8x16xf32> -> vector<8x16xf32>
    %c4 = arith.constant 4 : index
    %c0_20 = arith.constant 0 : index
    %35 = vector.load %arg3[%c4, %c0_20] : memref<6x256xf32, #tpu.memory_space<vmem>>, vector<1x16xf32>
    %36 = vector.broadcast %35 : vector<1x16xf32> to vector<8x16xf32>
    %37 = arith.addf %34, %36 : vector<8x16xf32>
    %cst_21 = arith.constant 0.000000e+00 : f32
    %38 = vector.broadcast %cst_21 : f32 to vector<8x16xf32>
    %39 = arith.maximumf %37, %38 : vector<8x16xf32>
    %40 = arith.truncf %39 : vector<8x16xf32> to vector<8x16xbf16>
    %c496 = arith.constant 496 : index
    %c0_22 = arith.constant 0 : index
    %41 = vector.load %arg2[%c496, %c0_22] : memref<512x256xbf16, #tpu.memory_space<vmem>>, vector<16x4xbf16>
    %cst_23 = arith.constant dense<0.000000e+00> : vector<8x4xf32>
    %42 = tpu.matmul %40, %41, %cst_23 {dimension_numbers = #tpu.dot_dimension_numbers<[1], [0], [0], [1], [0, 0, 1, 1], [], []>} : vector<8x16xbf16>, vector<16x4xbf16>, vector<8x4xf32> -> vector<8x4xf32>
    %c5 = arith.constant 5 : index
    %c0_24 = arith.constant 0 : index
    %43 = vector.load %arg3[%c5, %c0_24] : memref<6x256xf32, #tpu.memory_space<vmem>>, vector<1x4xf32>
    %44 = vector.broadcast %43 : vector<1x4xf32> to vector<8x4xf32>
    %45 = arith.addf %42, %44 : vector<8x4xf32>
    %c0_25 = arith.constant 0 : index
    %c0_26 = arith.constant 0 : index
    %46 = vector.load %arg4[%c0_25, %c0_26] : memref<8x4xf32, #tpu.memory_space<vmem>>, vector<8x4xf32>
    tpu.vector_store %arg4[%c0_25, %c0_26], %45 {strides = array<i32>} : memref<8x4xf32, #tpu.memory_space<vmem>>, vector<8x4xf32>,
    return
  }
  func.func @transform_0(%arg0: i32) -> (i32, i32) {
    %c0_i32 = arith.constant 0 : i32
    %c0_i32_0 = arith.constant 0 : i32
    return %arg0, %c0_i32 : i32, i32
  }
  func.func @transform_1(%arg0: i32) -> (i32, i32) {
    %c0_i32 = arith.constant 0 : i32
    %c0_i32_0 = arith.constant 0 : i32
    %c0_i32_1 = arith.constant 0 : i32
    return %c0_i32, %c0_i32_0 : i32, i32
  }
  func.func @transform_2(%arg0: i32) -> (i32, i32) {
    %c0_i32 = arith.constant 0 : i32
    %c0_i32_0 = arith.constant 0 : i32
    %c0_i32_1 = arith.constant 0 : i32
    return %c0_i32, %c0_i32_0 : i32, i32
  }
  func.func @transform_3(%arg0: i32) -> (i32, i32) {
    %c0_i32 = arith.constant 0 : i32
    %c0_i32_0 = arith.constant 0 : i32
    return %arg0, %c0_i32 : i32, i32
  }
}

</mosaic_0001>

<llo_original>
// kernel: tpu_custom_call.1
$region0: #{tpu_custom_call.1}
  #allocation0 [shape = 'u32[]', space=smem, size = 0x4, offset = 0x4, fixed_abs, tag = 'smem constant byte address 0x4 - core index']
  #allocation1 [shape = 'u32[144,128]{1,0:T(1,128)}', space=vmem, size = 0x12000, scoped, tag = 'internal scratch']
  %s0 = inlined_call_operand.hbm [shape: bf16[8,128], index: 0, kind: input, shape index: {}]
  %s1 = inlined_call_operand.hbm [shape: bf16[512,256], index: 1, kind: input, shape index: {}]
  %s2 = inlined_call_operand.hbm [shape: f32[6,256], index: 2, kind: input, shape index: {}]
  %s3 = inlined_call_operand.vmem [shape: f32[8,4], index: 3, kind: output, shape index: {}]
  %s4 = sld [smem:[#allocation0]]
  $region34: #{tpu_custom_call.1} parent=0
    _
  %s6 = ssub.s32 1, %s4
  %s7 = scalar_select 0, %s6, %s4
  $region1: #{tpu_custom_call.1} parent=0
    #allocation2 [shape = 'u8[2048]{0}', space=vmem, size = 0x800, scoped, tag = 'input window, operand 0, single buffered']
    #allocation3 [shape = 's32[1]{0}', space=sflag, size = 0x4, scoped, tag = 'scoped memory for tpu_custom_call.1']
    #allocation4 [shape = 'u8[262144]{0}', space=vmem, size = 0x40000, scoped, tag = 'input window, operand 1, single buffered']
    #allocation5 [shape = 's32[1]{0}', space=sflag, size = 0x4, scoped, tag = 'scoped memory for tpu_custom_call.1']
    #allocation6 [shape = 'u8[8192]{0}', space=vmem, size = 0x2000, scoped, tag = 'input window, operand 2, single buffered']
    %8 = vsyncpa [#allocation3], 0
    %9 = vsyncpa [#allocation5], 0
    // Predicated region
    $region2: #{tpu_custom_call.1} parent=1 // pred_check
      _
    $region3: #{tpu_custom_call.1} parent=1 // pred_check_branch
      %11 = sbr.rel (0) target = $region5
    $region4: #{tpu_custom_call.1} parent=1 // pred_region
      %s13 = ssub.s32 64, 64
      %14 = vsyncadd [#allocation3], %s13
      %s16 = sshll.u32 [#allocation2], 4
      %s17 = int_to_ptr.vmem [resolvable:$true] %s16
      %19 = dma.hbm_to_vmem [thread:$0]  %s0, 64, %s17, [#allocation3]
    $region5: #{tpu_custom_call.1} parent=1 // pred_fallthru
      _
    // Predicated region
    $region6: #{tpu_custom_call.1} parent=1 // pred_check
      _
    $region7: #{tpu_custom_call.1} parent=1 // pred_check_branch
      %21 = sbr.rel (0) target = $region9
    $region8: #{tpu_custom_call.1} parent=1 // pred_region
      %s23 = ssub.s32 8192, 8192
      %24 = vsyncadd [#allocation5], %s23
      %s25 = sshll.u32 [#allocation4], 4
      %s26 = int_to_ptr.vmem [resolvable:$true] %s25
      %31 = dma.hbm_to_vmem [thread:$0]  %s1, 8192, %s26, [#allocation5], 128, 128, 8
    $region9: #{tpu_custom_call.1} parent=1 // pred_fallthru
      _
    // Predicated region
    $region10: #{tpu_custom_call.1} parent=1 // pred_check
      _
    $region11: #{tpu_custom_call.1} parent=1 // pred_check_branch
      %33 = sbr.rel (0) target = $region13
    $region12: #{tpu_custom_call.1} parent=1 // pred_region
      %s35 = ssub.s32 256, 256
      %36 = vsyncadd [#allocation5], %s35
      %s38 = sshll.u32 [#allocation6], 4
      %s39 = int_to_ptr.vmem [resolvable:$true] %s38
      %41 = dma.hbm_to_vmem [thread:$0]  %s2, 256, %s39, [#allocation5]
    $region13: #{tpu_custom_call.1} parent=1 // pred_fallthru
      _
    // Predicated region
    $region14: #{tpu_custom_call.1} parent=1 // pred_check
      _
    $region15: #{tpu_custom_call.1} parent=1 // pred_check_branch
      %43 = sbr.rel (0) target = $region17
    $region16: #{tpu_custom_call.1} parent=1 // pred_region
      %44 = dma.done [#allocation3], 64
    $region17: #{tpu_custom_call.1} parent=1 // pred_fallthru
      _
    // Predicated region
    $region18: #{tpu_custom_call.1} parent=1 // pred_check
      _
    $region19: #{tpu_custom_call.1} parent=1 // pred_check_branch
      %46 = sbr.rel (0) target = $region21
    $region20: #{tpu_custom_call.1} parent=1 // pred_region
      %47 = dma.done [#allocation5], 8192
    $region21: #{tpu_custom_call.1} parent=1 // pred_fallthru
      _
    // Predicated region
    $region22: #{tpu_custom_call.1} parent=1 // pred_check
      _
    $region23: #{tpu_custom_call.1} parent=1 // pred_check_branch
      %49 = sbr.rel (0) target = $region25
    $region24: #{tpu_custom_call.1} parent=1 // pred_region
      %50 = dma.done [#allocation5], 256
    $region25: #{tpu_custom_call.1} parent=1 // pred_fallthru
      _
    %v52 = vld [vmem:[#allocation2] sm:$0xf]
    %v53 = vld [vmem:[#allocation4] sm:$0xff]
    %v54 = vld [vmem:[#allocation4 + $0x8] sm:$0xff]
    %v55 = vld [vmem:[#allocation4 + $0x10] sm:$0xff]
    %v56 = vld [vmem:[#allocation4 + $0x18] sm:$0xff]
    %v57 = vld [vmem:[#allocation4 + $0x20] sm:$0xff]
    %v58 = vld [vmem:[#allocation4 + $0x28] sm:$0xff]
    %v59 = vld [vmem:[#allocation4 + $0x30] sm:$0xff]
    %v60 = vld [vmem:[#allocation4 + $0x38] sm:$0xff]
    %v61 = vld [vmem:[#allocation4 + $0x40] sm:$0xff]
    %v62 = vld [vmem:[#allocation4 + $0x48] sm:$0xff]
    %v63 = vld [vmem:[#allocation4 + $0x50] sm:$0xff]
    %v64 = vld [vmem:[#allocation4 + $0x58] sm:$0xff]
    %v65 = vld [vmem:[#allocation4 + $0x60] sm:$0xff]
    %v66 = vld [vmem:[#allocation4 + $0x68] sm:$0xff]
    %v67 = vld [vmem:[#allocation4 + $0x70] sm:$0xff]
    %v68 = vld [vmem:[#allocation4 + $0x78] sm:$0xff]
    %v69 = vld [vmem:[#allocation6] ss:$8 sm:$0x3]
    %v71 = vlaneseq
    %v72 = vshrl.u32 %v71, 7
    %v73 = vsub.s32 0, %v72
    %v74 = vrot.slane %v69, %v73
    %v75 = vlaneseq
    %v76 = vshrl.u32 %v75, 7
    %v77 = vsub.s32 1, %v76
    %v78 = vrot.slane %v69, %v77
    %v97 = vunpack.c.l.b16 %v53
    %v98 = vunpack.c.h.b16 %v53
    %v99 = vunpack.c.l.b16 %v54
    %v100 = vunpack.c.h.b16 %v54
    %v101 = vunpack.c.l.b16 %v55
    %v102 = vunpack.c.h.b16 %v55
    %v103 = vunpack.c.l.b16 %v56
    %v104 = vunpack.c.h.b16 %v56
    %v105 = vunpack.c.l.b16 %v57
    %v106 = vunpack.c.h.b16 %v57
    %v107 = vunpack.c.l.b16 %v58
    %v108 = vunpack.c.h.b16 %v58
    %v109 = vunpack.c.l.b16 %v59
    %v110 = vunpack.c.h.b16 %v59
    %v111 = vunpack.c.l.b16 %v60
    %v112 = vunpack.c.h.b16 %v60
    %v113 = vunpack.c.l.b16 %v61
    %v114 = vunpack.c.h.b16 %v61
    %v115 = vunpack.c.l.b16 %v62
    %v116 = vunpack.c.h.b16 %v62
    %v117 = vunpack.c.l.b16 %v63
    %v118 = vunpack.c.h.b16 %v63
    %v119 = vunpack.c.l.b16 %v64
    %v120 = vunpack.c.h.b16 %v64
    %v121 = vunpack.c.l.b16 %v65
    %v122 = vunpack.c.h.b16 %v65
    %v123 = vunpack.c.l.b16 %v66
    %v124 = vunpack.c.h.b16 %v66
    %v125 = vunpack.c.l.b16 %v67
    %v126 = vunpack.c.h.b16 %v67
    %v127 = vunpack.c.l.b16 %v68
    %v128 = vunpack.c.h.b16 %v68
    %v129 = vpack.c.b16 %v99, %v97
    %v130 = vpack.c.b16 %v100, %v98
    %v131 = vpack.c.b16 %v103, %v101
    %v132 = vpack.c.b16 %v104, %v102
    %v133 = vpack.c.b16 %v107, %v105
    %v134 = vpack.c.b16 %v108, %v106
    %v135 = vpack.c.b16 %v111, %v109
    %v136 = vpack.c.b16 %v112, %v110
    %v137 = vpack.c.b16 %v115, %v113
    %v138 = vpack.c.b16 %v116, %v114
    %v139 = vpack.c.b16 %v119, %v117
    %v140 = vpack.c.b16 %v120, %v118
    %v141 = vpack.c.b16 %v123, %v121
    %v142 = vpack.c.b16 %v124, %v122
    %v143 = vpack.c.b16 %v127, %v125
    %v144 = vpack.c.b16 %v128, %v126
    %161 = vmatprep.subr.bf16.mxu0 %v130
    %162 = vmatpush1.bf16.msra.mxu0 %v129
    %163 = vmatprep.subr.bf16.mxu0 %v132
    %164 = vmatpush1.bf16.msra.mxu0 %v131
    %165 = vmatprep.subr.bf16.mxu0 %v134
    %166 = vmatpush1.bf16.msra.mxu0 %v133
    %167 = vmatprep.subr.bf16.mxu0 %v136
    %168 = vmatpush1.bf16.msra.mxu0 %v135
    %169 = vmatprep.subr.bf16.mxu0 %v138
    %170 = vmatpush1.bf16.msra.mxu0 %v137
    %171 = vmatprep.subr.bf16.mxu0 %v140
    %172 = vmatpush1.bf16.msra.mxu0 %v139
    %173 = vmatprep.subr.bf16.mxu0 %v142
    %174 = vmatpush1.bf16.msra.mxu0 %v141
    %175 = vmatprep.subr.bf16.mxu0 %v144
    %176 = vmatpush1.bf16.msra.mxu0 %v143
    %177 = vmatprep.subr.bf16.mxu0 0
    %178 = vmatpush1.bf16.msra.mxu0 0
    %179 = vmatprep.subr.bf16.mxu0 0
    %180 = vmatpush1.bf16.msra.mxu0 0
    %181 = vmatprep.subr.bf16.mxu0 0
    %182 = vmatpush1.bf16.msra.mxu0 0
    %183 = vmatprep.subr.bf16.mxu0 0
    %184 = vmatpush1.bf16.msra.mxu0 0
    %185 = vmatprep.subr.bf16.mxu0 0
    %186 = vmatpush1.bf16.msra.mxu0 0
    %187 = vmatprep.subr.bf16.mxu0 0
    %188 = vmatpush1.bf16.msra.mxu0 0
    %189 = vmatprep.subr.bf16.mxu0 0
    %190 = vmatpush1.bf16.msra.mxu0 0
    %191 = vmatprep.subr.bf16.mxu0 0
    %192 = vmatpush1.bf16.msra.mxu0 0
    %193 = vmatprep.mubr.bf16.mxu0 0
    %194 = vmatmul.mubr.bf16.gmra.mrb[0].mxu0 %v52
    %v195 = vpop.f32.mrb[0].mxu0
    %v196 = vadd.f32 %v74, %v195
    %v197 = vpop.f32.mrb[0].mxu0
    %v198 = vadd.f32 %v78, %v197
    %v199 = vpop.f32.mrb[0].mxu0
    %v200 = vpop.f32.mrb[0].mxu0
    %201 = vdwg.mxu0
    %v202 = vmax.f32 %v196, 0.0
    %v203 = vmax.f32 %v198, 0.0
    %v204 = vpack.c.bf16 %v202, %v202
    %v205 = vpack.c.bf16 %v203, %v203
    %v206 = vld [vmem:[#allocation4 + $0x80] sm:$0xf]
    %v207 = vld [vmem:[#allocation4 + $0x88] sm:$0xf]
    %v208 = vld [vmem:[#allocation4 + $0x90] sm:$0xf]
    %v209 = vld [vmem:[#allocation4 + $0x98] sm:$0xf]
    %v210 = vld [vmem:[#allocation4 + $0xa0] sm:$0xf]
    %v211 = vld [vmem:[#allocation4 + $0xa8] sm:$0xf]
    %v212 = vld [vmem:[#allocation4 + $0xb0] sm:$0xf]
    %v213 = vld [vmem:[#allocation4 + $0xb8] sm:$0xf]
    %v214 = vld [vmem:[#allocation4 + $0xc0] sm:$0xf]
    %v215 = vld [vmem:[#allocation4 + $0xc8] sm:$0xf]
    %v216 = vld [vmem:[#allocation4 + $0xd0] sm:$0xf]
    %v217 = vld [vmem:[#allocation4 + $0xd8] sm:$0xf]
    %v218 = vld [vmem:[#allocation4 + $0xe0] sm:$0xf]
    %v219 = vld [vmem:[#allocation4 + $0xe8] sm:$0xf]
    %v220 = vld [vmem:[#allocation4 + $0xf0] sm:$0xf]
    %v221 = vld [vmem:[#allocation4 + $0xf8] sm:$0xf]
    %v222 = vld [vmem:[#allocation4 + $0x100] sm:$0xf]
    %v223 = vld [vmem:[#allocation4 + $0x108] sm:$0xf]
    %v224 = vld [vmem:[#allocation4 + $0x110] sm:$0xf]
    %v225 = vld [vmem:[#allocation4 + $0x118] sm:$0xf]
    %v226 = vld [vmem:[#allocation4 + $0x120] sm:$0xf]
    %v227 = vld [vmem:[#allocation4 + $0x128] sm:$0xf]
    %v228 = vld [vmem:[#allocation4 + $0x130] sm:$0xf]
    %v229 = vld [vmem:[#allocation4 + $0x138] sm:$0xf]
    %v230 = vld [vmem:[#allocation4 + $0x140] sm:$0xf]
    %v231 = vld [vmem:[#allocation4 + $0x148] sm:$0xf]
    %v232 = vld [vmem:[#allocation4 + $0x150] sm:$0xf]
    %v233 = vld [vmem:[#allocation4 + $0x158] sm:$0xf]
    %v234 = vld [vmem:[#allocation4 + $0x160] sm:$0xf]
    %v235 = vld [vmem:[#allocation4 + $0x168] sm:$0xf]
    %v236 = vld [vmem:[#allocation4 + $0x170] sm:$0xf]
    %v237 = vld [vmem:[#allocation4 + $0x178] sm:$0xf]
    %v238 = vld [vmem:[#allocation6 + $0x1] ss:$0 sm:$0xff]
    %v271 = vunpack.c.l.b16 %v206
    %v272 = vunpack.c.l.b16 %v207
    %v273 = vunpack.c.l.b16 %v208
    %v274 = vunpack.c.l.b16 %v209
    %v275 = vunpack.c.l.b16 %v210
    %v276 = vunpack.c.l.b16 %v211
    %v277 = vunpack.c.l.b16 %v212
    %v278 = vunpack.c.l.b16 %v213
    %v279 = vunpack.c.l.b16 %v214
    %v280 = vunpack.c.l.b16 %v215
    %v281 = vunpack.c.l.b16 %v216
    %v282 = vunpack.c.l.b16 %v217
    %v283 = vunpack.c.l.b16 %v218
    %v284 = vunpack.c.l.b16 %v219
    %v285 = vunpack.c.l.b16 %v220
    %v286 = vunpack.c.l.b16 %v221
    %v287 = vunpack.c.l.b16 %v222
    %v288 = vunpack.c.l.b16 %v223
    %v289 = vunpack.c.l.b16 %v224
    %v290 = vunpack.c.l.b16 %v225
    %v291 = vunpack.c.l.b16 %v226
    %v292 = vunpack.c.l.b16 %v227
    %v293 = vunpack.c.l.b16 %v228
    %v294 = vunpack.c.l.b16 %v229
    %v295 = vunpack.c.l.b16 %v230
    %v296 = vunpack.c.l.b16 %v231
    %v297 = vunpack.c.l.b16 %v232
    %v298 = vunpack.c.l.b16 %v233
    %v299 = vunpack.c.l.b16 %v234
    %v300 = vunpack.c.l.b16 %v235
    %v301 = vunpack.c.l.b16 %v236
    %v302 = vunpack.c.l.b16 %v237
    %v303 = vpack.c.b16 %v272, %v271
    %v304 = vpack.c.b16 %v274, %v273
    %v305 = vpack.c.b16 %v276, %v275
    %v306 = vpack.c.b16 %v278, %v277
    %v307 = vpack.c.b16 %v280, %v279
    %v308 = vpack.c.b16 %v282, %v281
    %v309 = vpack.c.b16 %v284, %v283
    %v310 = vpack.c.b16 %v286, %v285
    %v311 = vpack.c.b16 %v288, %v287
    %v312 = vpack.c.b16 %v290, %v289
    %v313 = vpack.c.b16 %v292, %v291
    %v314 = vpack.c.b16 %v294, %v293
    %v315 = vpack.c.b16 %v296, %v295
    %v316 = vpack.c.b16 %v298, %v297
    %v317 = vpack.c.b16 %v300, %v299
    %v318 = vpack.c.b16 %v302, %v301
    %335 = vmatprep.subr.bf16.mxu0 0
    %336 = vmatpush1.bf16.msra.mxu0 %v303
    %337 = vmatprep.subr.bf16.mxu0 0
    %338 = vmatpush1.bf16.msra.mxu0 %v304
    %339 = vmatprep.subr.bf16.mxu0 0
    %340 = vmatpush1.bf16.msra.mxu0 %v305
    %341 = vmatprep.subr.bf16.mxu0 0
    %342 = vmatpush1.bf16.msra.mxu0 %v306
    %343 = vmatprep.subr.bf16.mxu0 0
    %344 = vmatpush1.bf16.msra.mxu0 %v307
    %345 = vmatprep.subr.bf16.mxu0 0
    %346 = vmatpush1.bf16.msra.mxu0 %v308
    %347 = vmatprep.subr.bf16.mxu0 0
    %348 = vmatpush1.bf16.msra.mxu0 %v309
    %349 = vmatprep.subr.bf16.mxu0 0
    %350 = vmatpush1.bf16.msra.mxu0 %v310
    %351 = vmatprep.subr.bf16.mxu0 0
    %352 = vmatpush1.bf16.msra.mxu0 %v311
    %353 = vmatprep.subr.bf16.mxu0 0
    %354 = vmatpush1.bf16.msra.mxu0 %v312
    %355 = vmatprep.subr.bf16.mxu0 0
    %356 = vmatpush1.bf16.msra.mxu0 %v313
    %357 = vmatprep.subr.bf16.mxu0 0
    %358 = vmatpush1.bf16.msra.mxu0 %v314
    %359 = vmatprep.subr.bf16.mxu0 0
    %360 = vmatpush1.bf16.msra.mxu0 %v315
    %361 = vmatprep.subr.bf16.mxu0 0
    %362 = vmatpush1.bf16.msra.mxu0 %v316
    %363 = vmatprep.subr.bf16.mxu0 0
    %364 = vmatpush1.bf16.msra.mxu0 %v317
    %365 = vmatprep.subr.bf16.mxu0 0
    %366 = vmatpush1.bf16.msra.mxu0 %v318
    %367 = vmatprep.mubr.bf16.mxu0 %v205
    %368 = vmatmul.mubr.bf16.gmra.mrb[0].mxu0 %v204
    %v369 = vpop.f32.mrb[0].mxu0
    %v370 = vadd.f32 %v238, %v369
    %v371 = vpop.f32.mrb[0].mxu0
    %v372 = vpop.f32.mrb[0].mxu0
    %v373 = vpop.f32.mrb[0].mxu0
    %374 = vdwg.mxu0
    %v375 = vmax.f32 %v370, 0.0
    %v376 = vpack.c.bf16 %v375, %v375
    %v377 = vld [vmem:[#allocation4 + $0x180] sm:$0xf]
    %v378 = vld [vmem:[#allocation4 + $0x188] sm:$0xf]
    %v379 = vld [vmem:[#allocation4 + $0x190] sm:$0xf]
    %v380 = vld [vmem:[#allocation4 + $0x198] sm:$0xf]
    %v381 = vld [vmem:[#allocation4 + $0x1a0] sm:$0xf]
    %v382 = vld [vmem:[#allocation4 + $0x1a8] sm:$0xf]
    %v383 = vld [vmem:[#allocation4 + $0x1b0] sm:$0xf]
    %v384 = vld [vmem:[#allocation4 + $0x1b8] sm:$0xf]
    %v385 = vld [vmem:[#allocation6 + $0x2] ss:$0 sm:$0xff]
    %v394 = vunpack.c.l.b16 %v377
    %v395 = vunpack.c.l.b16 %v378
    %v396 = vunpack.c.l.b16 %v379
    %v397 = vunpack.c.l.b16 %v380
    %v398 = vunpack.c.l.b16 %v381
    %v399 = vunpack.c.l.b16 %v382
    %v400 = vunpack.c.l.b16 %v383
    %v401 = vunpack.c.l.b16 %v384
    %v402 = vpack.c.b16 %v395, %v394
    %v403 = vpack.c.b16 %v397, %v396
    %v404 = vpack.c.b16 %v399, %v398
    %v405 = vpack.c.b16 %v401, %v400
    %vm410 = vcmask 523264
    %v412 = vsel %vm410, %v376, 0
    %414 = vmatprep.subr.bf16.mxu0 0
    %415 = vmatpush1.bf16.msra.mxu0 %v402
    %416 = vmatprep.subr.bf16.mxu0 0
    %417 = vmatpush1.bf16.msra.mxu0 %v403
    %418 = vmatprep.subr.bf16.mxu0 0
    %419 = vmatpush1.bf16.msra.mxu0 %v404
    %420 = vmatprep.subr.bf16.mxu0 0
    %421 = vmatpush1.bf16.msra.mxu0 %v405
    %422 = vmatprep.subr.bf16.mxu0 0
    %423 = vmatpush1.bf16.msra.mxu0 0
    %424 = vmatprep.subr.bf16.mxu0 0
    %425 = vmatpush1.bf16.msra.mxu0 0
    %426 = vmatprep.subr.bf16.mxu0 0
    %427 = vmatpush1.bf16.msra.mxu0 0
    %428 = vmatprep.subr.bf16.mxu0 0
    %429 = vmatpush1.bf16.msra.mxu0 0
    %430 = vmatprep.subr.bf16.mxu0 0
    %431 = vmatpush1.bf16.msra.mxu0 0
    %432 = vmatprep.subr.bf16.mxu0 0
    %433 = vmatpush1.bf16.msra.mxu0 0
    %434 = vmatprep.subr.bf16.mxu0 0
    %435 = vmatpush1.bf16.msra.mxu0 0
    %436 = vmatprep.subr.bf16.mxu0 0
    %437 = vmatpush1.bf16.msra.mxu0 0
    %438 = vmatprep.subr.bf16.mxu0 0
    %439 = vmatpush1.bf16.msra.mxu0 0
    %440 = vmatprep.subr.bf16.mxu0 0
    %441 = vmatpush1.bf16.msra.mxu0 0
    %442 = vmatprep.subr.bf16.mxu0 0
    %443 = vmatpush1.bf16.msra.mxu0 0
    %444 = vmatprep.subr.bf16.mxu0 0
    %445 = vmatpush1.bf16.msra.mxu0 0
    %446 = vmatprep.mubr.bf16.mxu0 0
    %447 = vmatmul.mubr.bf16.gmra.mrb[0].mxu0 %v412
    %v448 = vpop.f32.mrb[0].mxu0
    %v449 = vadd.f32 %v385, %v448
    %v450 = vpop.f32.mrb[0].mxu0
    %v451 = vpop.f32.mrb[0].mxu0
    %v452 = vpop.f32.mrb[0].mxu0
    %453 = vdwg.mxu0
    %v454 = vmax.f32 %v449, 0.0
    %v455 = vpack.c.bf16 %v454, %v454
    %v456 = vld [vmem:[#allocation4 + $0x1c0] sm:$0xf]
    %v457 = vld [vmem:[#allocation4 + $0x1c8] sm:$0xf]
    %v458 = vld [vmem:[#allocation4 + $0x1d0] sm:$0xf]
    %v459 = vld [vmem:[#allocation4 + $0x1d8] sm:$0xf]
    %v460 = vld [vmem:[#allocation6 + $0x3] ss:$0 sm:$0xff]
    %v465 = vunpack.c.l.b16 %v456
    %v466 = vunpack.c.l.b16 %v457
    %v467 = vunpack.c.l.b16 %v458
    %v468 = vunpack.c.l.b16 %v459
    %v469 = vpack.c.b16 %v466, %v465
    %v470 = vpack.c.b16 %v468, %v467
    %vm473 = vcmask 261120
    %v475 = vsel %vm473, %v455, 0
    %477 = vmatprep.subr.bf16.mxu0 0
    %478 = vmatpush1.bf16.msra.mxu0 %v469
    %479 = vmatprep.subr.bf16.mxu0 0
    %480 = vmatpush1.bf16.msra.mxu0 %v470
    %481 = vmatprep.subr.bf16.mxu0 0
    %482 = vmatpush1.bf16.msra.mxu0 0
    %483 = vmatprep.subr.bf16.mxu0 0
    %484 = vmatpush1.bf16.msra.mxu0 0
    %485 = vmatprep.subr.bf16.mxu0 0
    %486 = vmatpush1.bf16.msra.mxu0 0
    %487 = vmatprep.subr.bf16.mxu0 0
    %488 = vmatpush1.bf16.msra.mxu0 0
    %489 = vmatprep.subr.bf16.mxu0 0
    %490 = vmatpush1.bf16.msra.mxu0 0
    %491 = vmatprep.subr.bf16.mxu0 0
    %492 = vmatpush1.bf16.msra.mxu0 0
    %493 = vmatprep.subr.bf16.mxu0 0
    %494 = vmatpush1.bf16.msra.mxu0 0
    %495 = vmatprep.subr.bf16.mxu0 0
    %496 = vmatpush1.bf16.msra.mxu0 0
    %497 = vmatprep.subr.bf16.mxu0 0
    %498 = vmatpush1.bf16.msra.mxu0 0
    %499 = vmatprep.subr.bf16.mxu0 0
    %500 = vmatpush1.bf16.msra.mxu0 0
    %501 = vmatprep.subr.bf16.mxu0 0
    %502 = vmatpush1.bf16.msra.mxu0 0
    %503 = vmatprep.subr.bf16.mxu0 0
    %504 = vmatpush1.bf16.msra.mxu0 0
    %505 = vmatprep.subr.bf16.mxu0 0
    %506 = vmatpush1.bf16.msra.mxu0 0
    %507 = vmatprep.subr.bf16.mxu0 0
    %508 = vmatpush1.bf16.msra.mxu0 0
    %509 = vmatprep.mubr.bf16.mxu0 0
    %510 = vmatmul.mubr.bf16.gmra.mrb[0].mxu0 %v475
    %v511 = vpop.f32.mrb[0].mxu0
    %v512 = vadd.f32 %v460, %v511
    %v513 = vpop.f32.mrb[0].mxu0
    %v514 = vpop.f32.mrb[0].mxu0
    %v515 = vpop.f32.mrb[0].mxu0
    %516 = vdwg.mxu0
    %v517 = vmax.f32 %v512, 0.0
    %v518 = vpack.c.bf16 %v517, %v517
    %v519 = vld [vmem:[#allocation4 + $0x1e0] sm:$0xf]
    %v520 = vld [vmem:[#allocation4 + $0x1e8] sm:$0xf]
    %v521 = vld [vmem:[#allocation6 + $0x4] ss:$0 sm:$0xff]
    %v524 = vunpack.c.l.b16 %v519
    %v525 = vunpack.c.l.b16 %v520
    %v526 = vpack.c.b16 %v525, %v524
    %vm528 = vcmask 130048
    %v530 = vsel %vm528, %v518, 0
    %532 = vmatprep.subr.bf16.mxu0 0
    %533 = vmatpush1.bf16.msra.mxu0 %v526
    %534 = vmatprep.subr.bf16.mxu0 0
    %535 = vmatpush1.bf16.msra.mxu0 0
    %536 = vmatprep.subr.bf16.mxu0 0
    %537 = vmatpush1.bf16.msra.mxu0 0
    %538 = vmatprep.subr.bf16.mxu0 0
    %539 = vmatpush1.bf16.msra.mxu0 0
    %540 = vmatprep.subr.bf16.mxu0 0
    %541 = vmatpush1.bf16.msra.mxu0 0
    %542 = vmatprep.subr.bf16.mxu0 0
    %543 = vmatpush1.bf16.msra.mxu0 0
    %544 = vmatprep.subr.bf16.mxu0 0
    %545 = vmatpush1.bf16.msra.mxu0 0
    %546 = vmatprep.subr.bf16.mxu0 0
    %547 = vmatpush1.bf16.msra.mxu0 0
    %548 = vmatprep.subr.bf16.mxu0 0
    %549 = vmatpush1.bf16.msra.mxu0 0
    %550 = vmatprep.subr.bf16.mxu0 0
    %551 = vmatpush1.bf16.msra.mxu0 0
    %552 = vmatprep.subr.bf16.mxu0 0
    %553 = vmatpush1.bf16.msra.mxu0 0
    %554 = vmatprep.subr.bf16.mxu0 0
    %555 = vmatpush1.bf16.msra.mxu0 0
    %556 = vmatprep.subr.bf16.mxu0 0
    %557 = vmatpush1.bf16.msra.mxu0 0
    %558 = vmatprep.subr.bf16.mxu0 0
    %559 = vmatpush1.bf16.msra.mxu0 0
    %560 = vmatprep.subr.bf16.mxu0 0
    %561 = vmatpush1.bf16.msra.mxu0 0
    %562 = vmatprep.subr.bf16.mxu0 0
    %563 = vmatpush1.bf16.msra.mxu0 0
    %564 = vmatprep.mubr.bf16.mxu0 0
    %565 = vmatmul.mubr.bf16.gmra.mrb[0].mxu0 %v530
    %v566 = vpop.f32.mrb[0].mxu0
    %v567 = vadd.f32 %v521, %v566
    %v568 = vpop.f32.mrb[0].mxu0
    %v569 = vpop.f32.mrb[0].mxu0
    %v570 = vpop.f32.mrb[0].mxu0
    %571 = vdwg.mxu0
    %v572 = vmax.f32 %v567, 0.0
    %v573 = vpack.c.bf16 %v572, %v572
    %v574 = vld [vmem:[#allocation4 + $0x1f0] sm:$0xf]
    %v575 = vld [vmem:[#allocation4 + $0x1f8] sm:$0xf]
    %v576 = vld [vmem:[#allocation6 + $0x5] ss:$0 sm:$0xff]
    %v579 = vunpack.c.l.b16 %v574
    %v580 = vunpack.c.l.b16 %v575
    %v581 = vpack.c.b16 %v580, %v579
    %v584 = vsel %vm528, %v573, 0
    %586 = vmatprep.subr.bf16.mxu0 0
    %587 = vmatpush1.bf16.msra.mxu0 %v581
    %588 = vmatprep.subr.bf16.mxu0 0
    %589 = vmatpush1.bf16.msra.mxu0 0
    %590 = vmatprep.subr.bf16.mxu0 0
    %591 = vmatpush1.bf16.msra.mxu0 0
    %592 = vmatprep.subr.bf16.mxu0 0
    %593 = vmatpush1.bf16.msra.mxu0 0
    %594 = vmatprep.subr.bf16.mxu0 0
    %595 = vmatpush1.bf16.msra.mxu0 0
    %596 = vmatprep.subr.bf16.mxu0 0
    %597 = vmatpush1.bf16.msra.mxu0 0
    %598 = vmatprep.subr.bf16.mxu0 0
    %599 = vmatpush1.bf16.msra.mxu0 0
    %600 = vmatprep.subr.bf16.mxu0 0
    %601 = vmatpush1.bf16.msra.mxu0 0
    %602 = vmatprep.subr.bf16.mxu0 0
    %603 = vmatpush1.bf16.msra.mxu0 0
    %604 = vmatprep.subr.bf16.mxu0 0
    %605 = vmatpush1.bf16.msra.mxu0 0
    %606 = vmatprep.subr.bf16.mxu0 0
    %607 = vmatpush1.bf16.msra.mxu0 0
    %608 = vmatprep.subr.bf16.mxu0 0
    %609 = vmatpush1.bf16.msra.mxu0 0
    %610 = vmatprep.subr.bf16.mxu0 0
    %611 = vmatpush1.bf16.msra.mxu0 0
    %612 = vmatprep.subr.bf16.mxu0 0
    %613 = vmatpush1.bf16.msra.mxu0 0
    %614 = vmatprep.subr.bf16.mxu0 0
    %615 = vmatpush1.bf16.msra.mxu0 0
    %616 = vmatprep.subr.bf16.mxu0 0
    %617 = vmatpush1.bf16.msra.mxu0 0
    %618 = vmatprep.mubr.bf16.mxu0 0
    %619 = vmatmul.mubr.bf16.gmra.mrb[0].mxu0 %v584
    %v620 = vpop.f32.mrb[0].mxu0
    %v621 = vadd.f32 %v576, %v620
    %v622 = vpop.f32.mrb[0].mxu0
    %v623 = vpop.f32.mrb[0].mxu0
    %v624 = vpop.f32.mrb[0].mxu0
    %625 = vdwg.mxu0
    %vm626 = vcmask 31744
    %627 = vst.msk [vmem:[%s3] sm:$0xff] %vm626, %v621
    // Predicated region
    $region26: #{tpu_custom_call.1} parent=1 // pred_check
      _
    $region27: #{tpu_custom_call.1} parent=1 // pred_check_branch
      %629 = sbr.rel (0) target = $region29
    $region28: #{tpu_custom_call.1} parent=1 // pred_region
      _
    $region29: #{tpu_custom_call.1} parent=1 // pred_fallthru
      _
    // Predicated region
    $region30: #{tpu_custom_call.1} parent=1 // pred_check
      _
    $region31: #{tpu_custom_call.1} parent=1 // pred_check_branch
      %631 = sbr.rel (0) target = $region33
    $region32: #{tpu_custom_call.1} parent=1 // pred_region
      _
    $region33: #{tpu_custom_call.1} parent=1 // pred_fallthru
      _
    %632 = vsyncpa [#allocation3], 1
    %633 = vsyncpa [#allocation5], 1

</llo_original>
